<compile_context>
chip_gen: v5e
topology: v5e:2x2
jax: 0.10.0
libtpu: 0.0.40
codegen_flags: <defaults>
</compile_context>

<pallas_src>
import math

import jax
import jax.numpy as jnp
from jax import lax
from jax.experimental import pallas as pl
from jax.experimental.pallas import tpu as pltpu

_EPS = 1e-12  # matches torch.nn.functional.normalize default


def _split_cosine_kernel(sigma_ref, xn_ref, wn_ref, o_ref, acc_ref):
    """One (TM, TN) output tile of sigma * xn @ wn^T, accumulated over k tiles.

    Grid is (batch_tiles, out_tiles, k_tiles) with the k axis innermost.  The
    f32 accumulator lives in VMEM scratch and is zeroed at k==0 and written
    out (scaled by sigma) at the last k step.  Both operands are already
    row-normalized, so the body is a pure MXU feed.
    """
    k = pl.program_id(2)

    @pl.when(k == 0)
    def _():
        acc_ref[...] = jnp.zeros_like(acc_ref)

    # Contract the shared feature dim of (TM, TK) x (TN, TK) directly — the
    # weight tile feeds the MXU in its native (O, D) layout, no transpose.
    acc_ref[...] += lax.dot_general(
        xn_ref[...],
        wn_ref[...],
        dimension_numbers=(((1,), (1,)), ((), ())),
        preferred_element_type=jnp.float32,
    )

    @pl.when(k == pl.num_programs(2) - 1)
    def _():
        o_ref[...] = (sigma_ref[0] * acc_ref[...]).astype(o_ref.dtype)


def _round_up(v, m):
    return (v + m - 1) // m * m


def _balanced_tile(total, max_tile, mult):
    """Largest tile <= max_tile that divides the padded extent with minimal waste."""
    total_r = _round_up(max(total, 1), mult)
    if total_r <= max_tile:
        return total_r
    n_tiles = -(-total_r // max_tile)
    return _round_up(-(-total // n_tiles), mult)


def _normalize_rows_f32(v):
    v32 = v.astype(jnp.float32)
    ssq = jnp.sum(v32 * v32, axis=-1, keepdims=True)
    # 1/max(||v||, eps) == rsqrt(max(||v||^2, eps^2)); zero rows -> 0 like torch.
    return v32 * lax.rsqrt(jnp.maximum(ssq, _EPS * _EPS))


def prepare_split_cosine_weight(w1, w2, Np, Dp, mx_dtype):
    """Fuse, row-normalize and pad the two weight matrices.

    Cacheable across forward calls (weights only change at optimizer steps);
    the normalized values are written straight into the padded buffer.
    """
    w = jnp.concatenate([w1.astype(jnp.float32), w2.astype(jnp.float32)], axis=0)
    wn = _normalize_rows_f32(w)
    N, D = wn.shape
    return jnp.zeros((Np, Dp), mx_dtype).at[:N, :D].set(wn.astype(mx_dtype))


def split_cosine_linear(x, w1, w2, sigma, *, tm=512, tn=512, tk=1024,
                        matmul_dtype=None, weight_resident=None,
                        prepared_weight=None):
    """SplitCosineLinear forward.

    x: (B, D); w1: (O1, D); w2: (O2, D); sigma: (1,) scalar.
    Returns (B, O1 + O2) = sigma * [cos(x, w1) | cos(x, w2)].

    matmul_dtype: optional MXU operand dtype override (e.g. jnp.bfloat16 for a
      3x+ MXU throughput win on v6e/v7x with f32 inputs; accumulation is f32).
    weight_resident: force/disable the TN=Np, TK=Dp weight-resident fast path
      (None = auto-decide from the weight size).
    prepared_weight: optional cached output of `prepare_split_cosine_weight`.
    """
    B, D = x.shape
    O1 = w1.shape[0]
    O2 = w2.shape[0]
    N = O1 + O2

    # MXU operand dtype: keep bf16 inputs as bf16 (f32 accumulation), else f32
    # unless the caller opts into bf16 operands.
    if matmul_dtype is not None:
        mx_dtype = jnp.dtype(matmul_dtype)
    elif x.dtype == jnp.bfloat16:
        mx_dtype = jnp.dtype(jnp.bfloat16)
    else:
        mx_dtype = jnp.dtype(jnp.float32)
    out_dtype = x.dtype
    in_item = mx_dtype.itemsize
    out_item = jnp.dtype(out_dtype).itemsize

    # Sublane multiple depends on packing: bf16 packs two rows per sublane.
    sub = 16 if mx_dtype == jnp.dtype(jnp.bfloat16) else 8

    # Balanced tiles: minimize padding waste while staying (8,128)-aligned.
    TM = _balanced_tile(B, tm, sub)
    TN = _balanced_tile(N, tn, 128)
    TK = _balanced_tile(D, tk, 128)

    # Weight-resident fast path: whole normalized weight stays in one VMEM
    # block, so its block index never changes and it is DMA'd exactly once.
    N_r = _round_up(N, 128)
    D_r = _round_up(D, 128)
    resident_ok = (N_r * D_r * in_item <= (4 << 20)
                   and TM * D_r * in_item <= (8 << 20)
                   and TM * N_r * 4 <= (4 << 20))
    if weight_resident is None:
        weight_resident = resident_ok
    if weight_resident:
        TN, TK = N_r, D_r

    Bp = _round_up(B, TM)
    Np = _round_up(N, TN)
    Dp = _round_up(D, TK)

    # Pre-normalize x (f32 rsqrt) once in the wrapper; zero padding changes
    # neither the row norms (computed before padding) nor the dot products.
    xn = _normalize_rows_f32(x)
    xp = jnp.zeros((Bp, Dp), mx_dtype).at[:B, :D].set(xn.astype(mx_dtype))

    if prepared_weight is None:
        wp = prepare_split_cosine_weight(w1, w2, Np, Dp, mx_dtype)
    else:
        wp = prepared_weight
    sigma32 = jnp.asarray(sigma, jnp.float32).reshape((1,))

    grid = (Bp // TM, Np // TN, Dp // TK)

    # Double-buffered x/W tiles + double-buffered out tile + f32 accumulator.
    vmem_needed = (2 * (TM * TK + TN * TK) * in_item
                   + 2 * TM * TN * out_item
                   + TM * TN * 4)
    vmem_limit = min(max(int(vmem_needed * 1.5) + (4 << 20), 32 << 20), 56 << 20)

    cost = pl.CostEstimate(
        flops=2 * Bp * Np * Dp,
        bytes_accessed=(Bp * Dp + Np * Dp) * in_item + Bp * Np * out_item,
        transcendentals=0,
    )

    out = pl.pallas_call(
        _split_cosine_kernel,
        out_shape=jax.ShapeDtypeStruct((Bp, Np), out_dtype),
        grid_spec=pltpu.PrefetchScalarGridSpec(
            num_scalar_prefetch=0,
            grid=grid,
            in_specs=[
                pl.BlockSpec(memory_space=pltpu.MemorySpace.SMEM),      # sigma
                pl.BlockSpec((TM, TK), lambda i, j, k: (i, k)),         # x tile
                pl.BlockSpec((TN, TK), lambda i, j, k: (j, k)),         # fused W tile
            ],
            out_specs=pl.BlockSpec((TM, TN), lambda i, j, k: (i, j)),
            scratch_shapes=[pltpu.VMEM((TM, TN), jnp.float32)],         # accumulator
        ),
        compiler_params=pltpu.CompilerParams(
            # Batch / out tiles are independent (megacore sharding on v7x);
            # the k axis owns the accumulator, so it must stay "arbitrary".
            dimension_semantics=("parallel", "parallel", "arbitrary"),
            vmem_limit_bytes=vmem_limit,
        ),
        cost_estimate=cost,
    )(sigma32, xp, wp)

    return out[:B, :N]


def _reference(x, w1, w2, sigma):
    eps = 1e-12

    def norm_rows(v):
        n = jnp.sqrt(jnp.sum(v * v, axis=-1, keepdims=True))
        return v / jnp.maximum(n, eps)

    out1 = norm_rows(x) @ norm_rows(w1).T
    out2 = norm_rows(x) @ norm_rows(w2).T
    return sigma[0] * jnp.concatenate([out1, out2], axis=1)


if __name__ == "__main__":
    key = jax.random.PRNGKey(0)

    # --- Test 1: module spec shapes ----------------------------------------
    # SplitCosineLinear(in_features=32, out_features1=8, out_features2=8, sigma=True)
    in_features, out_features1, out_features2 = 32, 8, 8
    batch = 4

    kx, k1, k2, kx2, k3, k4 = jax.random.split(key, 6)

    # Deterministic parameter init mirroring CosineLinear.reset_parameters:
    # uniform(-stdv, stdv) with stdv = 1/sqrt(in_features); sigma = 1.0.
    stdv = 1.0 / math.sqrt(in_features)
    w1 = jax.random.uniform(k1, (out_features1, in_features),
                            minval=-stdv, maxval=stdv, dtype=jnp.float32)
    w2 = jax.random.uniform(k2, (out_features2, in_features),
                            minval=-stdv, maxval=stdv, dtype=jnp.float32)
    sigma = jnp.ones((1,), dtype=jnp.float32)
    x = jax.random.normal(kx, (batch, in_features), dtype=jnp.float32)

    out = jax.block_until_ready(split_cosine_linear(x, w1, w2, sigma))
    ref = _reference(x, w1, w2, sigma)
    assert out.shape == (batch, out_features1 + out_features2)
    assert jnp.allclose(out, ref, atol=1e-5, rtol=1e-5)

    # --- Test 2: exercise the multi-tile grid (i, j and k accumulation) ----
    B2, D2, O1b, O2b = 20, 384, 96, 160
    stdv2 = 1.0 / math.sqrt(D2)
    w1b = jax.random.uniform(k3, (O1b, D2), minval=-stdv2, maxval=stdv2,
                             dtype=jnp.float32)
    w2b = jax.random.uniform(k4, (O2b, D2), minval=-stdv2, maxval=stdv2,
                             dtype=jnp.float32)
    x2 = jax.random.normal(kx2, (B2, D2), dtype=jnp.float32)
    sigma2 = jnp.full((1,), 1.5, dtype=jnp.float32)

    out2 = jax.block_until_ready(
        split_cosine_linear(x2, w1b, w2b, sigma2,
                            tm=8, tn=128, tk=128, weight_resident=False))
    ref2 = _reference(x2, w1b, w2b, sigma2)
    assert out2.shape == (B2, O1b + O2b)
    assert jnp.allclose(out2, ref2, atol=1e-4, rtol=1e-4)

    print("KERNEL_OK")
</pallas_src>

<mosaic_0001>
module attributes {stable_mosaic.version = 11 : i64} {
  func.func @_split_cosine_kernel(%arg0: i32, %arg1: i32, %arg2: i32, %arg3: memref<1xf32, #tpu.memory_space<smem>>, %arg4: memref<8x128xf32, #tpu.memory_space<vmem>>, %arg5: memref<128x128xf32, #tpu.memory_space<vmem>>, %arg6: memref<8x128xf32, #tpu.memory_space<vmem>>, %arg7: memref<8x128xf32, #tpu.memory_space<vmem>>) attributes {dimension_semantics = [#tpu.dimension_semantics<parallel>, #tpu.dimension_semantics<parallel>, #tpu.dimension_semantics<arbitrary>], iteration_bounds = array<i64: 1, 1, 1>, scalar_prefetch = 0 : i64, scratch_operands = 1 : i64, tpu.core_type = #tpu.core_type<tc>, window_params = [{transform_indices = @transform_0, window_bounds = array<i64: 1>}, {transform_indices = @transform_1, window_bounds = array<i64: 8, 128>}, {transform_indices = @transform_2, window_bounds = array<i64: 128, 128>}, {transform_indices = @transform_3, window_bounds = array<i64: 8, 128>}]} {
    %c0_i32 = arith.constant 0 : i32
    %0 = arith.cmpi eq, %arg2, %c0_i32 : i32
    %1 = arith.extui %0 : i1 to i32
    %c0_i32_0 = arith.constant 0 : i32
    %2 = arith.cmpi ne, %1, %c0_i32_0 : i32
    scf.if %2 {
      %cst_10 = arith.constant 0.000000e+00 : f32
      %12 = vector.broadcast %cst_10 : f32 to vector<8x128xf32>
      %c0_11 = arith.constant 0 : index
      %c0_12 = arith.constant 0 : index
      %13 = vector.load %arg7[%c0_11, %c0_12] : memref<8x128xf32, #tpu.memory_space<vmem>>, vector<8x128xf32>
      tpu.vector_store %arg7[%c0_11, %c0_12], %12 {strides = array<i32>} : memref<8x128xf32, #tpu.memory_space<vmem>>, vector<8x128xf32>,
    } else {
    }
    %c0 = arith.constant 0 : index
    %c0_1 = arith.constant 0 : index
    %3 = vector.load %arg7[%c0, %c0_1] : memref<8x128xf32, #tpu.memory_space<vmem>>, vector<8x128xf32>
    %c0_2 = arith.constant 0 : index
    %c0_3 = arith.constant 0 : index
    %4 = vector.load %arg4[%c0_2, %c0_3] : memref<8x128xf32, #tpu.memory_space<vmem>>, vector<8x128xf32>
    %c0_4 = arith.constant 0 : index
    %c0_5 = arith.constant 0 : index
    %5 = vector.load %arg5[%c0_4, %c0_5] : memref<128x128xf32, #tpu.memory_space<vmem>>, vector<128x128xf32>
    %cst = arith.constant dense<0.000000e+00> : vector<8x128xf32>
    %6 = tpu.matmul %4, %5, %cst {dimension_numbers = #tpu.dot_dimension_numbers<[1], [1], [0], [0], [0, 0, 1, 0], [], []>} : vector<8x128xf32>, vector<128x128xf32>, vector<8x128xf32> -> vector<8x128xf32>
    %7 = arith.addf %3, %6 : vector<8x128xf32>
    %c0_6 = arith.constant 0 : index
    %c0_7 = arith.constant 0 : index
    %8 = vector.load %arg7[%c0_6, %c0_7] : memref<8x128xf32, #tpu.memory_space<vmem>>, vector<8x128xf32>
    tpu.vector_store %arg7[%c0_6, %c0_7], %7 {strides = array<i32>} : memref<8x128xf32, #tpu.memory_space<vmem>>, vector<8x128xf32>,
    %c0_i32_8 = arith.constant 0 : i32
    %9 = arith.cmpi eq, %arg2, %c0_i32_8 : i32
    %10 = arith.extui %9 : i1 to i32
    %c0_i32_9 = arith.constant 0 : i32
    %11 = arith.cmpi ne, %10, %c0_i32_9 : i32
    scf.if %11 {
      %c0_10 = arith.constant 0 : index
      %12 = memref.load %arg3[%c0_10] : memref<1xf32, #tpu.memory_space<smem>>
      %c0_11 = arith.constant 0 : index
      %c0_12 = arith.constant 0 : index
      %13 = vector.load %arg7[%c0_11, %c0_12] : memref<8x128xf32, #tpu.memory_space<vmem>>, vector<8x128xf32>
      %14 = vector.broadcast %12 : f32 to vector<8x128xf32>
      %15 = arith.mulf %14, %13 : vector<8x128xf32>
      %c0_13 = arith.constant 0 : index
      %c0_14 = arith.constant 0 : index
      %16 = vector.load %arg6[%c0_13, %c0_14] : memref<8x128xf32, #tpu.memory_space<vmem>>, vector<8x128xf32>
      tpu.vector_store %arg6[%c0_13, %c0_14], %15 {strides = array<i32>} : memref<8x128xf32, #tpu.memory_space<vmem>>, vector<8x128xf32>,
    } else {
    }
    return
  }
  func.func @transform_0(%arg0: i32, %arg1: i32, %arg2: i32) -> i32 {
    %c0_i32 = arith.constant 0 : i32
    %c0_i32_0 = arith.constant 0 : i32
    return %c0_i32 : i32
  }
  func.func @transform_1(%arg0: i32, %arg1: i32, %arg2: i32) -> (i32, i32) {
    %c0_i32 = arith.constant 0 : i32
    return %arg0, %arg2 : i32, i32
  }
  func.func @transform_2(%arg0: i32, %arg1: i32, %arg2: i32) -> (i32, i32) {
    %c0_i32 = arith.constant 0 : i32
    return %arg1, %arg2 : i32, i32
  }
  func.func @transform_3(%arg0: i32, %arg1: i32, %arg2: i32) -> (i32, i32) {
    %c0_i32 = arith.constant 0 : i32
    return %arg0, %arg1 : i32, i32
  }
}

</mosaic_0001>

<llo_original>
// kernel: tpu_custom_call.1
$region0: #{tpu_custom_call.1}
  #allocation0 [shape = 'u32[]', space=smem, size = 0x4, offset = 0x4, fixed_abs, tag = 'smem constant byte address 0x4 - core index']
  #allocation1 [shape = 'u32[72,128]{1,0:T(1,128)}', space=vmem, size = 0x9000, scoped, tag = 'internal scratch']
  #allocation2 [shape = 'f32[8,128]{1,0:T(8,128)}', space=vmem, size = 0x1000, scoped, tag = 'scratch operand']
  #allocation3 [shape = 'f32[1]{0:T(128)S(6)}', space=smem, size = 0x200, scoped, tag = 'scoped memory for tpu_custom_call.1']
  %s0 = inlined_call_operand.<no memory space> [shape: f32[1], index: 0, kind: input, shape index: {}]
  %s1 = inlined_call_operand.hbm [shape: f32[8,128], index: 1, kind: input, shape index: {}]
  %s2 = inlined_call_operand.hbm [shape: f32[128,128], index: 2, kind: input, shape index: {}]
  %s3 = inlined_call_operand.hbm [shape: f32[8,128], index: 3, kind: output, shape index: {}]
  %s4 = sld [smem:[#allocation0]]
  $region38: #{tpu_custom_call.1} parent=0
    _
  %s6 = ssub.s32 1, %s4
  %s7 = scalar_select 0, %s6, %s4
  %8 = sst [smem:[#allocation3]] %s0
  $region1: #{tpu_custom_call.1} parent=0
    #allocation4 [shape = 'u8[4096]{0}', space=vmem, size = 0x1000, scoped, tag = 'input window, operand 1, single buffered']
    #allocation5 [shape = 's32[1]{0}', space=sflag, size = 0x4, scoped, tag = 'scoped memory for tpu_custom_call.1']
    #allocation6 [shape = 's32[1]{0}', space=sflag, size = 0x4, scoped, tag = 'scoped memory for tpu_custom_call.1']
    #allocation7 [shape = 'u8[65536]{0}', space=vmem, size = 0x10000, scoped, tag = 'input window, operand 2, single buffered']
    #allocation8 [shape = 's32[1]{0}', space=sflag, size = 0x4, scoped, tag = 'scoped memory for tpu_custom_call.1']
    #allocation9 [shape = 'u8[4096]{0}', space=vmem, size = 0x1000, scoped, tag = 'output window, operand 0, single buffered']
    %9 = vsyncpa [#allocation5], 0
    %10 = vsyncpa [#allocation8], 0
    %11 = vsyncpa [#allocation6], 0
    // Predicated region
    $region2: #{tpu_custom_call.1} parent=1 // pred_check
      _
    $region3: #{tpu_custom_call.1} parent=1 // pred_check_branch
      %13 = sbr.rel (0) target = $region5
    $region4: #{tpu_custom_call.1} parent=1 // pred_region
      _
    $region5: #{tpu_custom_call.1} parent=1 // pred_fallthru
      _
    // Predicated region
    $region6: #{tpu_custom_call.1} parent=1 // pred_check
      _
    $region7: #{tpu_custom_call.1} parent=1 // pred_check_branch
      %15 = sbr.rel (0) target = $region9
    $region8: #{tpu_custom_call.1} parent=1 // pred_region
      %17 = vsyncadd [#allocation5], 0
      %s19 = sshll.u32 %s1, 4
      %s20 = int_to_ptr.hbm [resolvable:$true] %s19
      %s21 = sshll.u32 [#allocation4], 4
      %s22 = int_to_ptr.vmem [resolvable:$true] %s21
      %24 = dma.hbm_to_vmem [thread:$0]  %s20, 128, %s22, [#allocation5]
    $region9: #{tpu_custom_call.1} parent=1 // pred_fallthru
      _
    // Predicated region
    $region10: #{tpu_custom_call.1} parent=1 // pred_check
      _
    $region11: #{tpu_custom_call.1} parent=1 // pred_check_branch
      %26 = sbr.rel (0) target = $region13
    $region12: #{tpu_custom_call.1} parent=1 // pred_region
      %28 = vsyncadd [#allocation8], 0
      %s29 = sshll.u32 %s2, 4
      %s30 = int_to_ptr.hbm [resolvable:$true] %s29
      %s31 = sshll.u32 [#allocation7], 4
      %s32 = int_to_ptr.vmem [resolvable:$true] %s31
      %37 = dma.hbm_to_vmem [thread:$0]  %s30, 2048, %s32, [#allocation8], 128, 128, 8
    $region13: #{tpu_custom_call.1} parent=1 // pred_fallthru
      _
    // Predicated region
    $region14: #{tpu_custom_call.1} parent=1 // pred_check
      _
    $region15: #{tpu_custom_call.1} parent=1 // pred_check_branch
      %39 = sbr.rel (0) target = $region17
    $region16: #{tpu_custom_call.1} parent=1 // pred_region
      %41 = dma.done [#allocation5], 128
    $region17: #{tpu_custom_call.1} parent=1 // pred_fallthru
      _
    // Predicated region
    $region18: #{tpu_custom_call.1} parent=1 // pred_check
      _
    $region19: #{tpu_custom_call.1} parent=1 // pred_check_branch
      %43 = sbr.rel (0) target = $region21
    $region20: #{tpu_custom_call.1} parent=1 // pred_region
      %45 = dma.done [#allocation8], 2048
    $region21: #{tpu_custom_call.1} parent=1 // pred_fallthru
      _
    %p46 = scmp.eq.s32.totalorder 0, 0
    // Predicated region
    $region22: #{tpu_custom_call.1} parent=1 // pred_check
      %p47 = pneg %p46
    $region23: #{tpu_custom_call.1} parent=1 // pred_check_branch
      %49 = sbr.rel (%p47) target = $region25
    $region24: #{tpu_custom_call.1} parent=1 // pred_region
      %50 = vst [vmem:[#allocation2] sm:$0xff] 0.0
    $region25: #{tpu_custom_call.1} parent=1 // pred_fallthru
      _
    %v51 = vld [vmem:[#allocation2] sm:$0xff]
    %v52 = vld [vmem:[#allocation4] sm:$0xff]
    %v53 = vld [vmem:[#allocation7] sm:$0xff]
    %v54 = vld [vmem:[#allocation7 + $0x8] sm:$0xff]
    %v55 = vld [vmem:[#allocation7 + $0x10] sm:$0xff]
    %v56 = vld [vmem:[#allocation7 + $0x18] sm:$0xff]
    %v57 = vld [vmem:[#allocation7 + $0x20] sm:$0xff]
    %v58 = vld [vmem:[#allocation7 + $0x28] sm:$0xff]
    %v59 = vld [vmem:[#allocation7 + $0x30] sm:$0xff]
    %v60 = vld [vmem:[#allocation7 + $0x38] sm:$0xff]
    %v61 = vld [vmem:[#allocation7 + $0x40] sm:$0xff]
    %v62 = vld [vmem:[#allocation7 + $0x48] sm:$0xff]
    %v63 = vld [vmem:[#allocation7 + $0x50] sm:$0xff]
    %v64 = vld [vmem:[#allocation7 + $0x58] sm:$0xff]
    %v65 = vld [vmem:[#allocation7 + $0x60] sm:$0xff]
    %v66 = vld [vmem:[#allocation7 + $0x68] sm:$0xff]
    %v67 = vld [vmem:[#allocation7 + $0x70] sm:$0xff]
    %v68 = vld [vmem:[#allocation7 + $0x78] sm:$0xff]
    %69 = vmatpush.xpose.msra.mxu0 %v68
    %70 = vmatpush.xpose.msra.mxu0 %v67
    %71 = vmatpush.xpose.msra.mxu0 %v66
    %72 = vmatpush.xpose.msra.mxu0 %v65
    %73 = vmatpush.xpose.msra.mxu0 %v64
    %74 = vmatpush.xpose.msra.mxu0 %v63
    %75 = vmatpush.xpose.msra.mxu0 %v62
    %76 = vmatpush.xpose.msra.mxu0 %v61
    %77 = vmatpush.xpose.msra.mxu0 %v60
    %78 = vmatpush.xpose.msra.mxu0 %v59
    %79 = vmatpush.xpose.msra.mxu0 %v58
    %80 = vmatpush.xpose.msra.mxu0 %v57
    %81 = vmatpush.xpose.msra.mxu0 %v56
    %82 = vmatpush.xpose.msra.mxu0 %v55
    %83 = vmatpush.xpose.msra.mxu0 %v54
    %84 = vmatpush.xpose.msra.mxu0 %v53
    %85 = vmatmul.f32.gmra.mxu0 %v52
    %v86 = vpop.f32.mrf.mxu0
    %v87 = vadd.f32 0.0, %v86
    %88 = vdwg.mxu0
    %v89 = vadd.f32 %v51, %v87
    %90 = vst [vmem:[#allocation2] sm:$0xff] %v89
    // Predicated region
    $region26: #{tpu_custom_call.1} parent=1 // pred_check
      %p91 = pneg %p46
    $region27: #{tpu_custom_call.1} parent=1 // pred_check_branch
      %93 = sbr.rel (%p91) target = $region29
    $region28: #{tpu_custom_call.1} parent=1 // pred_region
      %s94 = sld [smem:[#allocation3]]
      %v95 = vld [vmem:[#allocation2] sm:$0xff]
      %v96 = vstv %s94
      %v97 = vmul.f32 %v96, %v95
      %98 = vst [vmem:[#allocation9] sm:$0xff] %v97
    $region29: #{tpu_custom_call.1} parent=1 // pred_fallthru
      _
    // Predicated region
    $region30: #{tpu_custom_call.1} parent=1 // pred_check
      _
    $region31: #{tpu_custom_call.1} parent=1 // pred_check_branch
      %100 = sbr.rel (0) target = $region33
    $region32: #{tpu_custom_call.1} parent=1 // pred_region
      %102 = vsyncadd [#allocation6], 0
      %s104 = sshll.u32 [#allocation9], 4
      %s105 = int_to_ptr.vmem [resolvable:$true] %s104
      %s106 = sshll.u32 %s3, 4
      %s107 = int_to_ptr.hbm [resolvable:$true] %s106
      %109 = dma.vmem_to_hbm [thread:$0]  %s105, 128, %s107, [#allocation6]
    $region33: #{tpu_custom_call.1} parent=1 // pred_fallthru
      _
    // Predicated region
    $region34: #{tpu_custom_call.1} parent=1 // pred_check
      _
    $region35: #{tpu_custom_call.1} parent=1 // pred_check_branch
      %111 = sbr.rel (0) target = $region37
    $region36: #{tpu_custom_call.1} parent=1 // pred_region
      %113 = dma.done [#allocation6], 128
    $region37: #{tpu_custom_call.1} parent=1 // pred_fallthru
      _
    %114 = vsyncpa [#allocation5], 1
    %115 = vsyncpa [#allocation8], 1
    %116 = vsyncpa [#allocation6], 1

</llo_original>
